<compile_context>
chip_gen: v7x
topology: tpu7x:2x2x1
jax: 0.10.0
libtpu: 0.0.40
codegen_flags: <defaults>
</compile_context>

<pallas_src>
import functools

import jax
import jax.numpy as jnp
from jax.experimental import pallas as pl
from jax.experimental.pallas import tpu as pltpu


def _rrrb_conv3x3_kernel(x_ref, w_ref, m_ref, o_ref, *, W):
    # x_ref: (N*C, P)          folded activations; P = H*W on lanes
    # w_ref: (N*C, 9*N*C + 1)  block-diagonal weight slab + bias column
    # m_ref: (10, P)           {0,1} per-tap validity masks; row 9 = ones (bias)
    # o_ref: (N*C, P)          lane-dense output (P multiple of 128)
    P = x_ref.shape[1]
    x = x_ref[...]                                   # (N*C, P) f32
    m = m_ref[...]                                   # (10, P)  f32 {0,1}

    # Build the matmul RHS directly in registers (no VMEM scratch round-trip).
    # For tap (kh, kw) the value needed at flat output position p = h*W + w is
    # x[:, p + d] with d = (kh-1)*W + (kw-1); a static lane rotation fetches it
    # and the precomputed mask zeroes every wrapped (i.e. zero-padded) lane.
    pieces = []
    for kh in range(3):
        for kw in range(3):
            dh, dw = kh - 1, kw - 1
            shift = (-(dh * W + dw)) % P             # static roll amount
            shifted = x if shift == 0 else pltpu.roll(x, shift, axis=1)
            t = kh * 3 + kw
            pieces.append(shifted * m[t:t + 1, :])   # (N*C, P), full 8-row tile
    pieces.append(m[9:10, :])                        # ones row -> bias term
    patches = jnp.concatenate(pieces, axis=0)        # (9*N*C + 1, P)

    # Single MXU push: (N*C, 9*N*C+1) x (9*N*C+1, P) -> (N*C, P), f32 acc.
    o_ref[...] = jnp.dot(w_ref[...], patches,
                         preferred_element_type=jnp.float32).astype(o_ref.dtype)


def rrrb_forward(x_nchw, weight_oihw, bias):
    """Forward pass of RRRB: out = Conv2d(C, C, 3, stride=1, pad=1)(x).

    x_nchw:      (N, C, H, W)   -- PyTorch NCHW convention
    weight_oihw: (C, C, 3, 3)   -- PyTorch Conv2d weight layout
    bias:        (C,)
    returns:     (N, C, H, W)
    """
    N, C, H, W = x_nchw.shape
    P = H * W                 # lane axis (256 here -> fully dense vst)
    NC = N * C                # sublane axis (8 here -> full vreg occupancy)

    # Free, contiguous reshape: fold the batch into the channel/sublane axis.
    x_flat = x_nchw.reshape(NC, P)

    # Block-diagonal weight slab: output row n*C+o uses weight[o, i, kh, kw]
    # only against input rows of the SAME image n.  Shape (N*C, 9*N*C).
    w_taps = jnp.transpose(weight_oihw, (2, 3, 0, 1)).reshape(9, C, C)  # (9,Co,Ci)
    eye_n = jnp.eye(N, dtype=weight_oihw.dtype)
    w_bd = jnp.einsum("nm,toi->tnomi", eye_n, w_taps)                   # (9,N,C,N,C)
    w_big = jnp.transpose(w_bd, (1, 2, 0, 3, 4)).reshape(NC, 9 * NC)
    # Bias folded in as an extra K column (matches the mask's ones row).
    b_col = jnp.tile(bias, N).reshape(NC, 1)
    w_slab = jnp.concatenate([w_big, b_col], axis=1)                    # (NC, 9*NC+1)

    # Host-precomputed {0,1} validity mask of every flat pixel for each tap
    # (reproduces Conv2d's implicit zero padding); last row = ones for bias.
    pos = jnp.arange(P, dtype=jnp.int32)
    hh, ww = pos // W, pos % W
    rows = []
    for kh in range(3):
        for kw in range(3):
            dh, dw = kh - 1, kw - 1
            rows.append((hh >= -dh) & (hh < H - dh) & (ww >= -dw) & (ww < W - dw))
    rows.append(jnp.ones((P,), dtype=bool))
    mask = jnp.stack(rows, axis=0).astype(x_nchw.dtype)                 # (10, P)

    kernel = functools.partial(_rrrb_conv3x3_kernel, W=W)
    # Single invocation (no grid): every operand is a whole-array VMEM block.
    out_flat = pl.pallas_call(
        kernel,
        out_shape=jax.ShapeDtypeStruct((NC, P), x_nchw.dtype),
    )(x_flat, w_slab, mask)

    return out_flat.reshape(N, C, H, W)              # free reshape back to NCHW


if __name__ == "__main__":
    key = jax.random.PRNGKey(0)
    k_x, k_w, k_b = jax.random.split(key, 3)

    N, C, H, W = 2, 4, 16, 16  # n_feats = 4
    x = jax.random.normal(k_x, (N, C, H, W), dtype=jnp.float32)
    # Deterministic parameters (shapes from nn.Conv2d(n_feats, n_feats, 3, 1, 1)).
    weight = jax.random.normal(k_w, (C, C, 3, 3), dtype=jnp.float32) * 0.1
    bias = jax.random.normal(k_b, (C,), dtype=jnp.float32) * 0.1

    out = jax.block_until_ready(rrrb_forward(x, weight, bias))

    # Reference check with XLA's conv (NCHW, OIHW).
    ref = jax.lax.conv_general_dilated(
        x, weight, window_strides=(1, 1), padding=((1, 1), (1, 1)),
        dimension_numbers=("NCHW", "OIHW", "NCHW"),
    ) + bias.reshape(1, C, 1, 1)
    ref = jax.block_until_ready(ref)

    assert out.shape == (N, C, H, W)
    assert jnp.allclose(out, ref, atol=2e-4, rtol=2e-4)
    print("KERNEL_OK")
</pallas_src>

<mosaic_0001>
module attributes {stable_mosaic.version = 11 : i64} {
  func.func @_rrrb_conv3x3_kernel(%arg0: memref<8x256xf32, #tpu.memory_space<vmem>>, %arg1: memref<8x73xf32, #tpu.memory_space<vmem>>, %arg2: memref<10x256xf32, #tpu.memory_space<vmem>>, %arg3: memref<8x256xf32, #tpu.memory_space<vmem>>) attributes {dimension_semantics = [], scalar_prefetch = 0 : i64, scratch_operands = 0 : i64, tpu.core_type = #tpu.core_type<tc>} {
    %c0 = arith.constant 0 : index
    %c0_0 = arith.constant 0 : index
    %0 = vector.load %arg0[%c0, %c0_0] : memref<8x256xf32, #tpu.memory_space<vmem>>, vector<8x256xf32>
    %c0_1 = arith.constant 0 : index
    %c0_2 = arith.constant 0 : index
    %1 = vector.load %arg2[%c0_1, %c0_2] : memref<10x256xf32, #tpu.memory_space<vmem>>, vector<10x256xf32>
    %c17_i32 = arith.constant 17 : i32
    %2 = tpu.dynamic_rotate %0 by %c17_i32 dim 1 : vector<8x256xf32>, i32 -> vector<8x256xf32>
    %3 = vector.extract_strided_slice %1 {offsets = [0, 0], sizes = [1, 256], strides = [1, 1]} : vector<10x256xf32> to vector<1x256xf32>
    %4 = vector.broadcast %3 : vector<1x256xf32> to vector<8x256xf32>
    %5 = arith.mulf %2, %4 : vector<8x256xf32>
    %c16_i32 = arith.constant 16 : i32
    %6 = tpu.dynamic_rotate %0 by %c16_i32 dim 1 : vector<8x256xf32>, i32 -> vector<8x256xf32>
    %7 = vector.extract_strided_slice %1 {offsets = [1, 0], sizes = [1, 256], strides = [1, 1]} : vector<10x256xf32> to vector<1x256xf32>
    %8 = vector.broadcast %7 : vector<1x256xf32> to vector<8x256xf32>
    %9 = arith.mulf %6, %8 : vector<8x256xf32>
    %c15_i32 = arith.constant 15 : i32
    %10 = tpu.dynamic_rotate %0 by %c15_i32 dim 1 : vector<8x256xf32>, i32 -> vector<8x256xf32>
    %11 = vector.extract_strided_slice %1 {offsets = [2, 0], sizes = [1, 256], strides = [1, 1]} : vector<10x256xf32> to vector<1x256xf32>
    %12 = vector.broadcast %11 : vector<1x256xf32> to vector<8x256xf32>
    %13 = arith.mulf %10, %12 : vector<8x256xf32>
    %c1_i32 = arith.constant 1 : i32
    %14 = tpu.dynamic_rotate %0 by %c1_i32 dim 1 : vector<8x256xf32>, i32 -> vector<8x256xf32>
    %15 = vector.extract_strided_slice %1 {offsets = [3, 0], sizes = [1, 256], strides = [1, 1]} : vector<10x256xf32> to vector<1x256xf32>
    %16 = vector.broadcast %15 : vector<1x256xf32> to vector<8x256xf32>
    %17 = arith.mulf %14, %16 : vector<8x256xf32>
    %18 = vector.extract_strided_slice %1 {offsets = [4, 0], sizes = [1, 256], strides = [1, 1]} : vector<10x256xf32> to vector<1x256xf32>
    %19 = vector.broadcast %18 : vector<1x256xf32> to vector<8x256xf32>
    %20 = arith.mulf %0, %19 : vector<8x256xf32>
    %c255_i32 = arith.constant 255 : i32
    %21 = tpu.dynamic_rotate %0 by %c255_i32 dim 1 : vector<8x256xf32>, i32 -> vector<8x256xf32>
    %22 = vector.extract_strided_slice %1 {offsets = [5, 0], sizes = [1, 256], strides = [1, 1]} : vector<10x256xf32> to vector<1x256xf32>
    %23 = vector.broadcast %22 : vector<1x256xf32> to vector<8x256xf32>
    %24 = arith.mulf %21, %23 : vector<8x256xf32>
    %c241_i32 = arith.constant 241 : i32
    %25 = tpu.dynamic_rotate %0 by %c241_i32 dim 1 : vector<8x256xf32>, i32 -> vector<8x256xf32>
    %26 = vector.extract_strided_slice %1 {offsets = [6, 0], sizes = [1, 256], strides = [1, 1]} : vector<10x256xf32> to vector<1x256xf32>
    %27 = vector.broadcast %26 : vector<1x256xf32> to vector<8x256xf32>
    %28 = arith.mulf %25, %27 : vector<8x256xf32>
    %c240_i32 = arith.constant 240 : i32
    %29 = tpu.dynamic_rotate %0 by %c240_i32 dim 1 : vector<8x256xf32>, i32 -> vector<8x256xf32>
    %30 = vector.extract_strided_slice %1 {offsets = [7, 0], sizes = [1, 256], strides = [1, 1]} : vector<10x256xf32> to vector<1x256xf32>
    %31 = vector.broadcast %30 : vector<1x256xf32> to vector<8x256xf32>
    %32 = arith.mulf %29, %31 : vector<8x256xf32>
    %c239_i32 = arith.constant 239 : i32
    %33 = tpu.dynamic_rotate %0 by %c239_i32 dim 1 : vector<8x256xf32>, i32 -> vector<8x256xf32>
    %34 = vector.extract_strided_slice %1 {offsets = [8, 0], sizes = [1, 256], strides = [1, 1]} : vector<10x256xf32> to vector<1x256xf32>
    %35 = vector.broadcast %34 : vector<1x256xf32> to vector<8x256xf32>
    %36 = arith.mulf %33, %35 : vector<8x256xf32>
    %37 = vector.extract_strided_slice %1 {offsets = [9, 0], sizes = [1, 256], strides = [1, 1]} : vector<10x256xf32> to vector<1x256xf32>
    %38 = tpu.concatenate %5, %9, %13, %17, %20, %24, %28, %32, %36, %37 in 0 : vector<8x256xf32>, vector<8x256xf32>, vector<8x256xf32>, vector<8x256xf32>, vector<8x256xf32>, vector<8x256xf32>, vector<8x256xf32>, vector<8x256xf32>, vector<8x256xf32>, vector<1x256xf32> -> vector<73x256xf32>
    %c0_3 = arith.constant 0 : index
    %c0_4 = arith.constant 0 : index
    %39 = vector.load %arg1[%c0_3, %c0_4] : memref<8x73xf32, #tpu.memory_space<vmem>>, vector<8x73xf32>
    %cst = arith.constant dense<0.000000e+00> : vector<8x256xf32>
    %40 = tpu.matmul %39, %38, %cst {dimension_numbers = #tpu.dot_dimension_numbers<[1], [0], [0], [1], [0, 0, 1, 1], [], []>} : vector<8x73xf32>, vector<73x256xf32>, vector<8x256xf32> -> vector<8x256xf32>
    %c0_5 = arith.constant 0 : index
    %c0_6 = arith.constant 0 : index
    %41 = vector.load %arg3[%c0_5, %c0_6] : memref<8x256xf32, #tpu.memory_space<vmem>>, vector<8x256xf32>
    tpu.vector_store %arg3[%c0_5, %c0_6], %40 {strides = array<i32>} : memref<8x256xf32, #tpu.memory_space<vmem>>, vector<8x256xf32>,
    return
  }
}

</mosaic_0001>

<llo_original>
// kernel: tpu_custom_call.1
$region0: #{tpu_custom_call.1}
  #allocation0 [shape = 'u32[]', space=smem, size = 0x4, offset = 0x4, fixed_abs, tag = 'smem constant byte address 0x4 - core index']
  #allocation1 [shape = 'u32[144,128]{1,0:T(1,128)}', space=vmem, size = 0x12000, scoped, tag = 'internal scratch']
  %s0 = inlined_call_operand.hbm [shape: f32[8,256], index: 0, kind: input, shape index: {}]
  %s1 = inlined_call_operand.hbm [shape: f32[8,73], index: 1, kind: input, shape index: {}]
  %s2 = inlined_call_operand.hbm [shape: f32[10,256], index: 2, kind: input, shape index: {}]
  %s3 = inlined_call_operand.hbm [shape: f32[8,256], index: 3, kind: output, shape index: {}]
  %s4 = sld [smem:[#allocation0]]
  $region34: #{tpu_custom_call.1} parent=0
    _
  %s6 = ssub.s32 1, %s4
  %s7 = scalar_select 0, %s6, %s4
  $region1: #{tpu_custom_call.1} parent=0
    #allocation2 [shape = 'u8[8192]{0}', space=vmem, size = 0x2000, scoped, tag = 'input window, operand 0, single buffered']
    #allocation3 [shape = 's32[1]{0}', space=sflag, size = 0x4, scoped, tag = 'scoped memory for tpu_custom_call.1']
    #allocation4 [shape = 's32[1]{0}', space=sflag, size = 0x4, scoped, tag = 'scoped memory for tpu_custom_call.1']
    #allocation5 [shape = 'u8[4096]{0}', space=vmem, size = 0x1000, scoped, tag = 'input window, operand 1, single buffered']
    #allocation6 [shape = 's32[1]{0}', space=sflag, size = 0x4, scoped, tag = 'scoped memory for tpu_custom_call.1']
    #allocation7 [shape = 'u8[16384]{0}', space=vmem, size = 0x4000, scoped, tag = 'input window, operand 2, single buffered']
    #allocation8 [shape = 'u8[8192]{0}', space=vmem, size = 0x2000, scoped, tag = 'output window, operand 0, single buffered']
    %8 = vsyncpa [#allocation3], 0
    %9 = vsyncpa [#allocation6], 0
    %10 = vsyncpa [#allocation4], 0
    // Predicated region
    $region2: #{tpu_custom_call.1} parent=1 // pred_check
      _
    $region3: #{tpu_custom_call.1} parent=1 // pred_check_branch
      %12 = sbr.rel (0) target = $region5
    $region4: #{tpu_custom_call.1} parent=1 // pred_region
      %s14 = ssub.s32 256, 256
      %15 = vsyncadd [#allocation3], %s14
      %s17 = sshll.u32 [#allocation2], 4
      %s18 = int_to_ptr.vmem [resolvable:$true] %s17
      %20 = dma.hbm_to_vmem [thread:$0]  %s0, 256, %s18, [#allocation3]
    $region5: #{tpu_custom_call.1} parent=1 // pred_fallthru
      _
    // Predicated region
    $region6: #{tpu_custom_call.1} parent=1 // pred_check
      _
    $region7: #{tpu_custom_call.1} parent=1 // pred_check_branch
      %22 = sbr.rel (0) target = $region9
    $region8: #{tpu_custom_call.1} parent=1 // pred_region
      %s24 = ssub.s32 128, 128
      %25 = vsyncadd [#allocation6], %s24
      %s27 = sshll.u32 [#allocation5], 4
      %s28 = int_to_ptr.vmem [resolvable:$true] %s27
      %30 = dma.hbm_to_vmem [thread:$0]  %s1, 128, %s28, [#allocation6]
    $region9: #{tpu_custom_call.1} parent=1 // pred_fallthru
      _
    // Predicated region
    $region10: #{tpu_custom_call.1} parent=1 // pred_check
      _
    $region11: #{tpu_custom_call.1} parent=1 // pred_check_branch
      %32 = sbr.rel (0) target = $region13
    $region12: #{tpu_custom_call.1} parent=1 // pred_region
      %s34 = ssub.s32 512, 512
      %35 = vsyncadd [#allocation6], %s34
      %s36 = sshll.u32 [#allocation7], 4
      %s37 = int_to_ptr.vmem [resolvable:$true] %s36
      %42 = dma.hbm_to_vmem [thread:$0]  %s2, 512, %s37, [#allocation6], 256, 256, 16
    $region13: #{tpu_custom_call.1} parent=1 // pred_fallthru
      _
    // Predicated region
    $region14: #{tpu_custom_call.1} parent=1 // pred_check
      _
    $region15: #{tpu_custom_call.1} parent=1 // pred_check_branch
      %44 = sbr.rel (0) target = $region17
    $region16: #{tpu_custom_call.1} parent=1 // pred_region
      %45 = dma.done [#allocation3], 256
    $region17: #{tpu_custom_call.1} parent=1 // pred_fallthru
      _
    // Predicated region
    $region18: #{tpu_custom_call.1} parent=1 // pred_check
      _
    $region19: #{tpu_custom_call.1} parent=1 // pred_check_branch
      %47 = sbr.rel (0) target = $region21
    $region20: #{tpu_custom_call.1} parent=1 // pred_region
      %48 = dma.done [#allocation6], 128
    $region21: #{tpu_custom_call.1} parent=1 // pred_fallthru
      _
    // Predicated region
    $region22: #{tpu_custom_call.1} parent=1 // pred_check
      _
    $region23: #{tpu_custom_call.1} parent=1 // pred_check_branch
      %50 = sbr.rel (0) target = $region25
    $region24: #{tpu_custom_call.1} parent=1 // pred_region
      %51 = dma.done [#allocation6], 512
    $region25: #{tpu_custom_call.1} parent=1 // pred_fallthru
      _
    %v52 = vld [vmem:[#allocation2] sm:$0xff]
    %v53 = vld [vmem:[#allocation2 + $0x8] sm:$0xff]
    %v54 = vld [vmem:[#allocation7] sm:$0xff]
    %v55 = vld [vmem:[#allocation7 + $0x8] sm:$0xff]
    %v56 = vld [vmem:[#allocation7 + $0x10] sm:$0x3]
    %v57 = vld [vmem:[#allocation7 + $0x18] sm:$0x3]
    %58 = vrot.lane.b32.xlu0 %v52, 17
    %v59 = vpop.permute.xlu0 %58
    %60 = vrot.lane.b32.xlu0 %v53, 17
    %v61 = vpop.permute.xlu0 %60
    %v62 = vlaneseq
    %v63 = vand.u32 %v62, 127
    %vm64 = vcmp.lt.s32.totalorder %v63, 17
    %v65 = vsel %vm64, %v59, %v61
    %v66 = vsel %vm64, %v61, %v59
    %v67 = vlaneseq
    %v68 = vshrl.u32 %v67, 7
    %v69 = vsub.s32 0, %v68
    %v70 = vrot.slane %v54, %v69
    %v71 = vlaneseq
    %v72 = vshrl.u32 %v71, 7
    %v73 = vsub.s32 0, %v72
    %v74 = vrot.slane %v55, %v73
    %v75 = vmul.f32 %v66, %v70
    %v76 = vmul.f32 %v65, %v74
    %77 = vrot.lane.b32.xlu0 %v52, 16
    %v78 = vpop.permute.xlu0 %77
    %79 = vrot.lane.b32.xlu0 %v53, 16
    %v80 = vpop.permute.xlu0 %79
    %vm81 = vcmp.lt.s32.totalorder %v63, 16
    %v82 = vsel %vm81, %v78, %v80
    %v83 = vsel %vm81, %v80, %v78
    %v84 = vlaneseq
    %v85 = vshrl.u32 %v84, 7
    %v86 = vsub.s32 1, %v85
    %v87 = vrot.slane %v54, %v86
    %v88 = vlaneseq
    %v89 = vshrl.u32 %v88, 7
    %v90 = vsub.s32 1, %v89
    %v91 = vrot.slane %v55, %v90
    %v92 = vmul.f32 %v83, %v87
    %v93 = vmul.f32 %v82, %v91
    %94 = vrot.lane.b32.xlu0 %v52, 15
    %v95 = vpop.permute.xlu0 %94
    %96 = vrot.lane.b32.xlu0 %v53, 15
    %v97 = vpop.permute.xlu0 %96
    %vm98 = vcmp.lt.s32.totalorder %v63, 15
    %v99 = vsel %vm98, %v95, %v97
    %v100 = vsel %vm98, %v97, %v95
    %v101 = vlaneseq
    %v102 = vshrl.u32 %v101, 7
    %v103 = vsub.s32 2, %v102
    %v104 = vrot.slane %v54, %v103
    %v105 = vlaneseq
    %v106 = vshrl.u32 %v105, 7
    %v107 = vsub.s32 2, %v106
    %v108 = vrot.slane %v55, %v107
    %v109 = vmul.f32 %v100, %v104
    %v110 = vmul.f32 %v99, %v108
    %111 = vrot.lane.b32.xlu0 %v52, 1
    %v112 = vpop.permute.xlu0 %111
    %113 = vrot.lane.b32.xlu0 %v53, 1
    %v114 = vpop.permute.xlu0 %113
    %vm115 = vcmp.lt.s32.totalorder %v63, 1
    %v116 = vsel %vm115, %v112, %v114
    %v117 = vsel %vm115, %v114, %v112
    %v118 = vlaneseq
    %v119 = vshrl.u32 %v118, 7
    %v120 = vsub.s32 3, %v119
    %v121 = vrot.slane %v54, %v120
    %v122 = vlaneseq
    %v123 = vshrl.u32 %v122, 7
    %v124 = vsub.s32 3, %v123
    %v125 = vrot.slane %v55, %v124
    %v126 = vmul.f32 %v117, %v121
    %v127 = vmul.f32 %v116, %v125
    %v128 = vlaneseq
    %v129 = vshrl.u32 %v128, 7
    %v130 = vsub.s32 4, %v129
    %v131 = vrot.slane %v54, %v130
    %v132 = vlaneseq
    %v133 = vshrl.u32 %v132, 7
    %v134 = vsub.s32 4, %v133
    %v135 = vrot.slane %v55, %v134
    %v136 = vmul.f32 %v52, %v131
    %v137 = vmul.f32 %v53, %v135
    %138 = vrot.lane.b32.xlu0 %v52, 127
    %v139 = vpop.permute.xlu0 %138
    %140 = vrot.lane.b32.xlu0 %v53, 127
    %v141 = vpop.permute.xlu0 %140
    %vm142 = vcmp.lt.s32.totalorder %v63, 127
    %v143 = vsel %vm142, %v139, %v141
    %v144 = vsel %vm142, %v141, %v139
    %v145 = vlaneseq
    %v146 = vshrl.u32 %v145, 7
    %v147 = vsub.s32 5, %v146
    %v148 = vrot.slane %v54, %v147
    %v149 = vlaneseq
    %v150 = vshrl.u32 %v149, 7
    %v151 = vsub.s32 5, %v150
    %v152 = vrot.slane %v55, %v151
    %v153 = vmul.f32 %v143, %v148
    %v154 = vmul.f32 %v144, %v152
    %155 = vrot.lane.b32.xlu0 %v52, 113
    %v156 = vpop.permute.xlu0 %155
    %157 = vrot.lane.b32.xlu0 %v53, 113
    %v158 = vpop.permute.xlu0 %157
    %vm159 = vcmp.lt.s32.totalorder %v63, 113
    %v160 = vsel %vm159, %v156, %v158
    %v161 = vsel %vm159, %v158, %v156
    %v162 = vlaneseq
    %v163 = vshrl.u32 %v162, 7
    %v164 = vsub.s32 6, %v163
    %v165 = vrot.slane %v54, %v164
    %v166 = vlaneseq
    %v167 = vshrl.u32 %v166, 7
    %v168 = vsub.s32 6, %v167
    %v169 = vrot.slane %v55, %v168
    %v170 = vmul.f32 %v160, %v165
    %v171 = vmul.f32 %v161, %v169
    %172 = vrot.lane.b32.xlu0 %v52, 112
    %v173 = vpop.permute.xlu0 %172
    %174 = vrot.lane.b32.xlu0 %v53, 112
    %v175 = vpop.permute.xlu0 %174
    %vm176 = vcmp.lt.s32.totalorder %v63, 112
    %v177 = vsel %vm176, %v173, %v175
    %v178 = vsel %vm176, %v175, %v173
    %v179 = vlaneseq
    %v180 = vshrl.u32 %v179, 7
    %v181 = vsub.s32 7, %v180
    %v182 = vrot.slane %v54, %v181
    %v183 = vlaneseq
    %v184 = vshrl.u32 %v183, 7
    %v185 = vsub.s32 7, %v184
    %v186 = vrot.slane %v55, %v185
    %v187 = vmul.f32 %v177, %v182
    %v188 = vmul.f32 %v178, %v186
    %189 = vrot.lane.b32.xlu0 %v52, 111
    %v190 = vpop.permute.xlu0 %189
    %191 = vrot.lane.b32.xlu0 %v53, 111
    %v192 = vpop.permute.xlu0 %191
    %vm193 = vcmp.lt.s32.totalorder %v63, 111
    %v194 = vsel %vm193, %v190, %v192
    %v195 = vsel %vm193, %v192, %v190
    %v196 = vlaneseq
    %v197 = vshrl.u32 %v196, 7
    %v198 = vsub.s32 0, %v197
    %v199 = vrot.slane %v56, %v198
    %v200 = vlaneseq
    %v201 = vshrl.u32 %v200, 7
    %v202 = vsub.s32 0, %v201
    %v203 = vrot.slane %v57, %v202
    %v204 = vmul.f32 %v194, %v199
    %v205 = vmul.f32 %v195, %v203
    %v208 = vrot.slane %v56, 1
    %v209 = vrot.slane %v57, 1
    %v210 = vld [vmem:[#allocation5] sm:$0xff]
    %vm211 = vcmask 596992
    %v213 = vsel %vm211, %v210, 0
    %vm215 = vcmask 1040384
    %v216 = vsel %vm215, %v208, 0
    %v218 = vsel %vm215, %v209, 0
    %220 = vmatprep.subr.mxu0 %v76
    %221 = vmatpush1.msra.mxu0 %v75
    %222 = vmatprep.subr.mxu0 %v93
    %223 = vmatpush1.msra.mxu0 %v92
    %224 = vmatprep.subr.mxu0 %v110
    %225 = vmatpush1.msra.mxu0 %v109
    %226 = vmatprep.subr.mxu0 %v127
    %227 = vmatpush1.msra.mxu0 %v126
    %228 = vmatprep.subr.mxu0 %v137
    %229 = vmatpush1.msra.mxu0 %v136
    %230 = vmatprep.subr.mxu0 %v154
    %231 = vmatpush1.msra.mxu0 %v153
    %232 = vmatprep.subr.mxu0 %v171
    %233 = vmatpush1.msra.mxu0 %v170
    %234 = vmatprep.subr.mxu0 %v188
    %235 = vmatpush1.msra.mxu0 %v187
    %236 = vmatprep.subr.mxu0 %v205
    %237 = vmatpush1.msra.mxu0 %v204
    %238 = vmatprep.subr.mxu0 %v218
    %239 = vmatpush1.msra.mxu0 %v216
    %240 = vmatprep.subr.mxu0 0.0
    %241 = vmatpush1.msra.mxu0 0.0
    %242 = vmatprep.subr.mxu0 0.0
    %243 = vmatpush1.msra.mxu0 0.0
    %244 = vmatprep.subr.mxu0 0.0
    %245 = vmatpush1.msra.mxu0 0.0
    %246 = vmatprep.subr.mxu0 0.0
    %247 = vmatpush1.msra.mxu0 0.0
    %248 = vmatprep.subr.mxu0 0.0
    %249 = vmatpush1.msra.mxu0 0.0
    %250 = vmatprep.subr.mxu0 0.0
    %251 = vmatpush1.msra.mxu0 0.0
    %252 = vmatprep.subr.mxu0 0.0
    %253 = vmatpush1.msra.mxu0 0.0
    %254 = vmatprep.subr.mxu0 0.0
    %255 = vmatpush1.msra.mxu0 0.0
    %256 = vmatprep.subr.mxu0 0.0
    %257 = vmatpush1.msra.mxu0 0.0
    %258 = vmatprep.subr.mxu0 0.0
    %259 = vmatpush1.msra.mxu0 0.0
    %260 = vmatprep.subr.mxu0 0.0
    %261 = vmatpush1.msra.mxu0 0.0
    %262 = vmatprep.subr.mxu0 0.0
    %263 = vmatpush1.msra.mxu0 0.0
    %264 = vmatprep.subr.mxu0 0.0
    %265 = vmatpush1.msra.mxu0 0.0
    %266 = vmatprep.subr.mxu0 0.0
    %267 = vmatpush1.msra.mxu0 0.0
    %268 = vmatprep.subr.mxu0 0.0
    %269 = vmatpush1.msra.mxu0 0.0
    %270 = vmatprep.subr.mxu0 0.0
    %271 = vmatpush1.msra.mxu0 0.0
    %272 = vmatprep.subr.mxu0 0.0
    %273 = vmatpush1.msra.mxu0 0.0
    %274 = vmatprep.subr.mxu0 0.0
    %275 = vmatpush1.msra.mxu0 0.0
    %276 = vmatprep.subr.mxu0 0.0
    %277 = vmatpush1.msra.mxu0 0.0
    %278 = vmatprep.subr.mxu0 0.0
    %279 = vmatpush1.msra.mxu0 0.0
    %280 = vmatprep.subr.mxu0 0.0
    %281 = vmatpush1.msra.mxu0 0.0
    %282 = vmatprep.subr.mxu0 0.0
    %283 = vmatpush1.msra.mxu0 0.0
    %284 = vmatprep.mubr.f32.mxu0 0.0
    %285 = vmatmul.mubr.f32.gmra.mrb[0].mxu0 %v213
    %v286 = vpop.f32.mrb[0].mxu0
    %v287 = vadd.f32 0.0, %v286
    %v288 = vpop.f32.mrb[0].mxu0
    %v289 = vadd.f32 0.0, %v288
    %290 = vdwg.mxu0
    %291 = vst [vmem:[#allocation8] sm:$0xff] %v287
    %292 = vst [vmem:[#allocation8 + $0x8] sm:$0xff] %v289
    // Predicated region
    $region26: #{tpu_custom_call.1} parent=1 // pred_check
      _
    $region27: #{tpu_custom_call.1} parent=1 // pred_check_branch
      %294 = sbr.rel (0) target = $region29
    $region28: #{tpu_custom_call.1} parent=1 // pred_region
      %s296 = ssub.s32 256, 256
      %297 = vsyncadd [#allocation4], %s296
      %s299 = sshll.u32 [#allocation8], 4
      %s300 = int_to_ptr.vmem [resolvable:$true] %s299
      %302 = dma.vmem_to_hbm [thread:$0]  %s300, 256, %s3, [#allocation4]
    $region29: #{tpu_custom_call.1} parent=1 // pred_fallthru
      _
    // Predicated region
    $region30: #{tpu_custom_call.1} parent=1 // pred_check
      _
    $region31: #{tpu_custom_call.1} parent=1 // pred_check_branch
      %304 = sbr.rel (0) target = $region33
    $region32: #{tpu_custom_call.1} parent=1 // pred_region
      %305 = dma.done [#allocation4], 256
    $region33: #{tpu_custom_call.1} parent=1 // pred_fallthru
      _
    %306 = vsyncpa [#allocation3], 1
    %307 = vsyncpa [#allocation6], 1
    %308 = vsyncpa [#allocation4], 1

</llo_original>
